<compile_context>
chip_gen: v6e
topology: v6e:2x2x1
jax: 0.10.0
libtpu: 0.0.40
codegen_flags: <defaults>
</compile_context>

<pallas_src>
import functools
import math

import jax
import jax.numpy as jnp
from jax.experimental import pallas as pl
from jax.experimental.pallas import tpu as pltpu

EPS = 1e-08
LANE = 128


def _round_up(n, m):
    return ((n + m - 1) // m) * m


def _cdiv(a, b):
    return (a + b - 1) // b


# ----------------------------------------------------------------------------
# Kernel 1: one-shot hoisted weight prep.
#   W = tanh(W_hat) * sigmoid(M_hat)
#   Emits: w16 [L,P,P] bf16, g16 [L,P,P] bf16 (MXU operands for add/gate path)
#          w32 [L,P,P] f32 (W for the log-space path, kept full precision).
# ----------------------------------------------------------------------------
def _prep_weights_kernel(what_ref, mhat_ref, g_ref, w16_ref, g16_ref, w32_ref):
    w = jnp.tanh(what_ref[...]) * jax.nn.sigmoid(mhat_ref[...])
    w32_ref[...] = w
    w16_ref[...] = w.astype(jnp.bfloat16)
    g16_ref[...] = g_ref[...].astype(jnp.bfloat16)


def prep_weights(w_hat_s, m_hat_s, g_s):
    """Inputs [L, P, P] x3 (pre-transposed, zero-padded) -> (w16, g16, w32)."""
    L, P, _ = w_hat_s.shape
    return pl.pallas_call(
        _prep_weights_kernel,
        out_shape=(
            jax.ShapeDtypeStruct((L, P, P), jnp.bfloat16),
            jax.ShapeDtypeStruct((L, P, P), jnp.bfloat16),
            jax.ShapeDtypeStruct((L, P, P), jnp.float32),
        ),
        in_specs=[pl.BlockSpec((L, P, P), lambda: (0, 0, 0))] * 3,
        out_specs=[pl.BlockSpec((L, P, P), lambda: (0, 0, 0))] * 3,
    )(w_hat_s, m_hat_s, g_s)


# ----------------------------------------------------------------------------
# Kernel 2: fused multi-layer NALU forward over one batch tile.
# Inter-layer activations never leave VMEM/vregs.
# ----------------------------------------------------------------------------
def _fused_nalu_kernel(x_ref, w16_ref, g16_ref, w32_ref, y_ref, h_scr,
                       *, num_layers, in_dim):
    tb, p = h_scr.shape
    # Zero-extend the narrow [TB, in_dim] input tile to lane width P in VMEM
    # (padding lives only on-chip; HBM holds x at its natural width).
    h_scr[...] = jnp.zeros((tb, p), jnp.float32)
    h_scr[:, :in_dim] = x_ref[...]
    h = h_scr[...]

    # TODO(synk): if L*P*P weights ever exceed the VMEM budget (large L/P),
    # switch to a trailing "arbitrary" layer grid axis that streams one layer's
    # weights at a time with h carried in scratch, instead of this fully
    # resident unrolled loop.
    for l in range(num_layers):                       # static unrolled layers
        h16 = h.astype(jnp.bfloat16)
        # Additive path and gate logits: bf16 MXU operands, f32 accumulation.
        a = jnp.dot(h16, w16_ref[l], preferred_element_type=jnp.float32)
        g = jax.nn.sigmoid(
            jnp.dot(h16, g16_ref[l], preferred_element_type=jnp.float32))
        # Multiplicative (log-space) path stays f32 so exp() stays accurate.
        log_h = jnp.log(jnp.abs(h) + EPS)
        m = jnp.exp(
            jnp.dot(log_h, w32_ref[l], preferred_element_type=jnp.float32))
        h = m + g * (a - m)                           # == g*a + (1-g)*m
    y_ref[...] = h                                    # lane-dense [TB, P] store


def _choose_batch_tile(batch, target_rows=1024):
    """Pick (tile_rows, padded_batch): large tiles, near-zero padding waste,
    and >=2 grid tiles for bigger batches so v7x megacore can split them."""
    b8 = _round_up(batch, 8)
    if b8 <= 256:
        return b8, b8                                 # tiny batch: single tile
    n_tiles = max(2, _cdiv(b8, target_rows))
    tb = _round_up(_cdiv(b8, n_tiles), 8)
    return tb, n_tiles * tb


def nalu_forward(x, w16, g16, w32, out_dim):
    """x: [B, in_dim] f32; weights [L, P, P] (bf16, bf16, f32) -> [B, out_dim]."""
    B, in_dim = x.shape
    L, P, _ = w32.shape
    TB, B_pad = _choose_batch_tile(B)

    # Row-pad only when needed (never column-pad x in HBM).
    if B_pad != B:
        x = jnp.zeros((B_pad, in_dim), jnp.float32).at[:B].set(x)

    # Explicit VMEM budget: single-buffered resident weights + double-buffered
    # I/O tiles + the h scratch, with generous headroom (capped at 64 MiB so it
    # also fits v7x physical VMEM; v5e default scoped limit is only 16 MiB).
    weight_bytes = 2 * (L * P * P * 2) + L * P * P * 4
    io_bytes = 2 * (TB * in_dim * 4 + TB * P * 4)
    scratch_bytes = TB * P * 4
    vmem_limit = min(64 << 20,
                     max(16 << 20, 2 * (weight_bytes + io_bytes + scratch_bytes)))

    kernel = functools.partial(_fused_nalu_kernel, num_layers=L, in_dim=in_dim)
    # Weights have a constant index_map -> keep them resident, single-buffered.
    w_spec = pl.BlockSpec((L, P, P), lambda i: (0, 0, 0),
                          pipeline_mode=pl.Buffered(1))
    y_pad = pl.pallas_call(
        kernel,
        out_shape=jax.ShapeDtypeStruct((B_pad, P), jnp.float32),
        grid_spec=pltpu.PrefetchScalarGridSpec(
            num_scalar_prefetch=0,
            grid=(B_pad // TB,),
            in_specs=[
                pl.BlockSpec((TB, in_dim), lambda i: (i, 0)),   # narrow x tile
                w_spec,                                         # W  (bf16)
                w_spec,                                         # G  (bf16)
                w_spec,                                         # W  (f32)
            ],
            out_specs=pl.BlockSpec((TB, P), lambda i: (i, 0)),  # lane-dense out
            scratch_shapes=[pltpu.VMEM((TB, P), jnp.float32)],
        ),
        compiler_params=pltpu.CompilerParams(
            dimension_semantics=("parallel",),     # megacore batch split (v7x)
            vmem_limit_bytes=vmem_limit),
    )(x, w16, g16, w32)
    return y_pad[:B, :out_dim]


# ----------------------------------------------------------------------------
# Parameter init (mirrors the PyTorch module) + packing for the kernel
# ----------------------------------------------------------------------------
def kaiming_uniform(key, out_dim, in_dim):
    # torch.nn.init.kaiming_uniform_(t, a=sqrt(5)) on [out, in]: bound = 1/sqrt(fan_in)
    bound = 1.0 / math.sqrt(in_dim)
    return jax.random.uniform(
        key, (out_dim, in_dim), dtype=jnp.float32, minval=-bound, maxval=bound)


def init_nalu_params(key, num_layers, in_dim, hidden_dim, out_dim):
    """Returns a list of raw per-layer (W_hat, M_hat, G), each [out, in]."""
    params = []
    for i in range(num_layers):
        layer_in = hidden_dim if i > 0 else in_dim
        layer_out = hidden_dim if i < num_layers - 1 else out_dim
        key, k_g, k_w, k_m = jax.random.split(key, 4)
        G = kaiming_uniform(k_g, layer_out, layer_in)
        W_hat = kaiming_uniform(k_w, layer_out, layer_in)
        M_hat = kaiming_uniform(k_m, layer_out, layer_in)
        params.append((W_hat, M_hat, G))
    return params


def pack_params(params, P):
    """Transpose to [in, out], zero-pad to [P, P], stack to [L, P, P]."""
    L = len(params)
    w_hat_s = jnp.zeros((L, P, P), jnp.float32)
    m_hat_s = jnp.zeros((L, P, P), jnp.float32)
    g_s = jnp.zeros((L, P, P), jnp.float32)
    for l, (W_hat, M_hat, G) in enumerate(params):
        o, i = W_hat.shape
        w_hat_s = w_hat_s.at[l, :i, :o].set(W_hat.T)
        m_hat_s = m_hat_s.at[l, :i, :o].set(M_hat.T)
        g_s = g_s.at[l, :i, :o].set(G.T)
    return w_hat_s, m_hat_s, g_s


def nalu_reference(x, params):
    """Pure-JAX reference of the PyTorch forward (high-precision matmuls)."""
    out = x
    for (W_hat, M_hat, G) in params:
        W = jnp.tanh(W_hat) * jax.nn.sigmoid(M_hat)
        a = jnp.dot(out, W.T, precision="highest")
        g = jax.nn.sigmoid(jnp.dot(out, G.T, precision="highest"))
        m = jnp.exp(jnp.dot(jnp.log(jnp.abs(out) + EPS), W.T, precision="highest"))
        out = g * a + (1.0 - g) * m
    return out


if __name__ == "__main__":
    num_layers = 2
    in_dim = 16
    hidden_dim = 32
    out_dim = 8
    batch = 8

    key = jax.random.PRNGKey(0)
    key, kx = jax.random.split(key)
    x = jax.random.normal(kx, (batch, in_dim), dtype=jnp.float32)

    params = init_nalu_params(key, num_layers, in_dim, hidden_dim, out_dim)

    P = _round_up(max(in_dim, hidden_dim, out_dim), LANE)
    w_hat_s, m_hat_s, g_s = pack_params(params, P)

    # One-shot hoisted weight prep, then the fused multi-layer forward.
    w16, g16, w32 = prep_weights(w_hat_s, m_hat_s, g_s)
    fwd = jax.jit(functools.partial(nalu_forward, out_dim=out_dim))
    y = fwd(x, w16, g16, w32)
    jax.block_until_ready(y)

    assert y.shape == (batch, out_dim), y.shape
    assert bool(jnp.all(jnp.isfinite(y)))
    y_ref = nalu_reference(x, params)
    assert jnp.allclose(y, y_ref, rtol=5e-2, atol=5e-3), float(
        jnp.max(jnp.abs(y - y_ref)))
    print("KERNEL_OK")
</pallas_src>

<mosaic_0001>
module attributes {stable_mosaic.version = 11 : i64} {
  func.func @_prep_weights_kernel(%arg0: memref<2x128x128xf32, #tpu.memory_space<vmem>>, %arg1: memref<2x128x128xf32, #tpu.memory_space<vmem>>, %arg2: memref<2x128x128xf32, #tpu.memory_space<vmem>>, %arg3: memref<2x128x128xbf16, #tpu.memory_space<vmem>>, %arg4: memref<2x128x128xbf16, #tpu.memory_space<vmem>>, %arg5: memref<2x128x128xf32, #tpu.memory_space<vmem>>) attributes {dimension_semantics = [], scalar_prefetch = 0 : i64, scratch_operands = 0 : i64, tpu.core_type = #tpu.core_type<tc>} {
    %c0 = arith.constant 0 : index
    %c0_0 = arith.constant 0 : index
    %c0_1 = arith.constant 0 : index
    %0 = vector.load %arg0[%c0, %c0_0, %c0_1] : memref<2x128x128xf32, #tpu.memory_space<vmem>>, vector<2x128x128xf32>
    %1 = math.tanh %0 : vector<2x128x128xf32>
    %c0_2 = arith.constant 0 : index
    %c0_3 = arith.constant 0 : index
    %c0_4 = arith.constant 0 : index
    %2 = vector.load %arg1[%c0_2, %c0_3, %c0_4] : memref<2x128x128xf32, #tpu.memory_space<vmem>>, vector<2x128x128xf32>
    %3 = arith.negf %2 : vector<2x128x128xf32>
    %4 = math.exp %3 : vector<2x128x128xf32>
    %cst = arith.constant 1.000000e+00 : f32
    %5 = vector.broadcast %cst : f32 to vector<2x128x128xf32>
    %6 = arith.addf %5, %4 : vector<2x128x128xf32>
    %7 = arith.divf %5, %6 : vector<2x128x128xf32>
    %8 = arith.mulf %1, %7 : vector<2x128x128xf32>
    %c0_5 = arith.constant 0 : index
    %c0_6 = arith.constant 0 : index
    %c0_7 = arith.constant 0 : index
    %9 = vector.load %arg5[%c0_5, %c0_6, %c0_7] : memref<2x128x128xf32, #tpu.memory_space<vmem>>, vector<2x128x128xf32>
    tpu.vector_store %arg5[%c0_5, %c0_6, %c0_7], %8 {strides = array<i32>} : memref<2x128x128xf32, #tpu.memory_space<vmem>>, vector<2x128x128xf32>,
    %10 = arith.truncf %8 : vector<2x128x128xf32> to vector<2x128x128xbf16>
    %c0_8 = arith.constant 0 : index
    %c0_9 = arith.constant 0 : index
    %c0_10 = arith.constant 0 : index
    %11 = vector.load %arg3[%c0_8, %c0_9, %c0_10] : memref<2x128x128xbf16, #tpu.memory_space<vmem>>, vector<2x128x128xbf16>
    tpu.vector_store %arg3[%c0_8, %c0_9, %c0_10], %10 {strides = array<i32>} : memref<2x128x128xbf16, #tpu.memory_space<vmem>>, vector<2x128x128xbf16>,
    %c0_11 = arith.constant 0 : index
    %c0_12 = arith.constant 0 : index
    %c0_13 = arith.constant 0 : index
    %12 = vector.load %arg2[%c0_11, %c0_12, %c0_13] : memref<2x128x128xf32, #tpu.memory_space<vmem>>, vector<2x128x128xf32>
    %13 = arith.truncf %12 : vector<2x128x128xf32> to vector<2x128x128xbf16>
    %c0_14 = arith.constant 0 : index
    %c0_15 = arith.constant 0 : index
    %c0_16 = arith.constant 0 : index
    %14 = vector.load %arg4[%c0_14, %c0_15, %c0_16] : memref<2x128x128xbf16, #tpu.memory_space<vmem>>, vector<2x128x128xbf16>
    tpu.vector_store %arg4[%c0_14, %c0_15, %c0_16], %13 {strides = array<i32>} : memref<2x128x128xbf16, #tpu.memory_space<vmem>>, vector<2x128x128xbf16>,
    return
  }
}

</mosaic_0001>

<llo_original>
// kernel: tpu_custom_call.1
$region0: #{tpu_custom_call.1}
  #allocation0 [shape = 'u32[]', space=smem, size = 0x4, offset = 0x4, fixed_abs, tag = 'smem constant byte address 0x4 - core index']
  #allocation1 [shape = 'u32[144,128]{1,0:T(1,128)}', space=vmem, size = 0x12000, scoped, tag = 'internal scratch']
  %s0 = inlined_call_operand.hbm [shape: f32[2,128,128], index: 0, kind: input, shape index: {}]
  %s1 = inlined_call_operand.hbm [shape: f32[2,128,128], index: 1, kind: input, shape index: {}]
  %s2 = inlined_call_operand.hbm [shape: f32[2,128,128], index: 2, kind: input, shape index: {}]
  %s3 = inlined_call_operand.hbm [shape: bf16[2,128,128], index: 3, kind: output, shape index: {0}]
  %s4 = inlined_call_operand.hbm [shape: bf16[2,128,128], index: 4, kind: output, shape index: {1}]
  %s5 = inlined_call_operand.hbm [shape: f32[2,128,128], index: 5, kind: output, shape index: {2}]
  %6 = xla_tuple %s3, %s4, %s5
  %s7 = sld [smem:[#allocation0]]
  $region50: #{tpu_custom_call.1} parent=0
    _
  %s9 = ssub.s32 1, %s7
  %s10 = scalar_select 0, %s9, %s7
  $region1: #{tpu_custom_call.1} parent=0
    #allocation2 [shape = 'u8[131072]{0}', space=vmem, size = 0x20000, scoped, tag = 'input window, operand 0, single buffered']
    #allocation3 [shape = 's32[1]{0}', space=sflag, size = 0x4, scoped, tag = 'scoped memory for tpu_custom_call.1']
    #allocation4 [shape = 's32[1]{0}', space=sflag, size = 0x4, scoped, tag = 'scoped memory for tpu_custom_call.1']
    #allocation5 [shape = 'u8[131072]{0}', space=vmem, size = 0x20000, scoped, tag = 'input window, operand 1, single buffered']
    #allocation6 [shape = 's32[1]{0}', space=sflag, size = 0x4, scoped, tag = 'scoped memory for tpu_custom_call.1']
    #allocation7 [shape = 'u8[131072]{0}', space=vmem, size = 0x20000, scoped, tag = 'input window, operand 2, single buffered']
    #allocation8 [shape = 'u8[65536]{0}', space=vmem, size = 0x10000, scoped, tag = 'output window, operand 0, single buffered']
    #allocation9 [shape = 'u8[65536]{0}', space=vmem, size = 0x10000, scoped, tag = 'output window, operand 1, single buffered']
    #allocation10 [shape = 's32[1]{0}', space=sflag, size = 0x4, scoped, tag = 'scoped memory for tpu_custom_call.1']
    #allocation11 [shape = 'u8[131072]{0}', space=vmem, size = 0x20000, scoped, tag = 'output window, operand 2, single buffered']
    %11 = vsyncpa [#allocation3], 0
    %12 = vsyncpa [#allocation6], 0
    %13 = vsyncpa [#allocation4], 0
    %14 = vsyncpa [#allocation10], 0
    // Predicated region
    $region2: #{tpu_custom_call.1} parent=1 // pred_check
      _
    $region3: #{tpu_custom_call.1} parent=1 // pred_check_branch
      %16 = sbr.rel (0) target = $region5
    $region4: #{tpu_custom_call.1} parent=1 // pred_region
      %s18 = ssub.s32 4096, 4096
      %19 = vsyncadd [#allocation3], %s18
      %s20 = sshll.u32 [#allocation2], 4
      %s21 = int_to_ptr.vmem [resolvable:$true] %s20
      %26 = dma.hbm_to_vmem [thread:$0]  %s0, 4096, %s21, [#allocation3], 128, 128, 8
    $region5: #{tpu_custom_call.1} parent=1 // pred_fallthru
      _
    // Predicated region
    $region6: #{tpu_custom_call.1} parent=1 // pred_check
      _
    $region7: #{tpu_custom_call.1} parent=1 // pred_check_branch
      %28 = sbr.rel (0) target = $region9
    $region8: #{tpu_custom_call.1} parent=1 // pred_region
      %s30 = ssub.s32 4096, 4096
      %31 = vsyncadd [#allocation6], %s30
      %s32 = sshll.u32 [#allocation5], 4
      %s33 = int_to_ptr.vmem [resolvable:$true] %s32
      %38 = dma.hbm_to_vmem [thread:$0]  %s1, 4096, %s33, [#allocation6], 128, 128, 8
    $region9: #{tpu_custom_call.1} parent=1 // pred_fallthru
      _
    // Predicated region
    $region10: #{tpu_custom_call.1} parent=1 // pred_check
      _
    $region11: #{tpu_custom_call.1} parent=1 // pred_check_branch
      %40 = sbr.rel (0) target = $region13
    $region12: #{tpu_custom_call.1} parent=1 // pred_region
      %s42 = ssub.s32 4096, 4096
      %43 = vsyncadd [#allocation6], %s42
      %s44 = sshll.u32 [#allocation7], 4
      %s45 = int_to_ptr.vmem [resolvable:$true] %s44
      %50 = dma.hbm_to_vmem [thread:$0]  %s2, 4096, %s45, [#allocation6], 128, 128, 8
    $region13: #{tpu_custom_call.1} parent=1 // pred_fallthru
      _
    // Predicated region
    $region14: #{tpu_custom_call.1} parent=1 // pred_check
      _
    $region15: #{tpu_custom_call.1} parent=1 // pred_check_branch
      %52 = sbr.rel (0) target = $region17
    $region16: #{tpu_custom_call.1} parent=1 // pred_region
      %53 = dma.done [#allocation3], 4096
    $region17: #{tpu_custom_call.1} parent=1 // pred_fallthru
      _
    // Predicated region
    $region18: #{tpu_custom_call.1} parent=1 // pred_check
      _
    $region19: #{tpu_custom_call.1} parent=1 // pred_check_branch
      %55 = sbr.rel (0) target = $region21
    $region20: #{tpu_custom_call.1} parent=1 // pred_region
      %56 = dma.done [#allocation6], 4096
    $region21: #{tpu_custom_call.1} parent=1 // pred_fallthru
      _
    // Predicated region
    $region22: #{tpu_custom_call.1} parent=1 // pred_check
      _
    $region23: #{tpu_custom_call.1} parent=1 // pred_check_branch
      %58 = sbr.rel (0) target = $region25
    $region24: #{tpu_custom_call.1} parent=1 // pred_region
      %59 = dma.done [#allocation6], 4096
    $region25: #{tpu_custom_call.1} parent=1 // pred_fallthru
      _
    %v60 = vld [vmem:[#allocation2] sm:$0xff]
    %v61 = vld [vmem:[#allocation2 + $0x8] sm:$0xff]
    %v62 = vld [vmem:[#allocation2 + $0x10] sm:$0xff]
    %v63 = vld [vmem:[#allocation2 + $0x18] sm:$0xff]
    %v64 = vld [vmem:[#allocation2 + $0x20] sm:$0xff]
    %v65 = vld [vmem:[#allocation2 + $0x28] sm:$0xff]
    %v66 = vld [vmem:[#allocation2 + $0x30] sm:$0xff]
    %v67 = vld [vmem:[#allocation2 + $0x38] sm:$0xff]
    %v68 = vld [vmem:[#allocation2 + $0x40] sm:$0xff]
    %v69 = vld [vmem:[#allocation2 + $0x48] sm:$0xff]
    %v70 = vld [vmem:[#allocation2 + $0x50] sm:$0xff]
    %v71 = vld [vmem:[#allocation2 + $0x58] sm:$0xff]
    %v72 = vld [vmem:[#allocation2 + $0x60] sm:$0xff]
    %v73 = vld [vmem:[#allocation2 + $0x68] sm:$0xff]
    %v74 = vld [vmem:[#allocation2 + $0x70] sm:$0xff]
    %v75 = vld [vmem:[#allocation2 + $0x78] sm:$0xff]
    %v76 = vld [vmem:[#allocation2 + $0x80] sm:$0xff]
    %v77 = vld [vmem:[#allocation2 + $0x88] sm:$0xff]
    %v78 = vld [vmem:[#allocation2 + $0x90] sm:$0xff]
    %v79 = vld [vmem:[#allocation2 + $0x98] sm:$0xff]
    %v80 = vld [vmem:[#allocation2 + $0xa0] sm:$0xff]
    %v81 = vld [vmem:[#allocation2 + $0xa8] sm:$0xff]
    %v82 = vld [vmem:[#allocation2 + $0xb0] sm:$0xff]
    %v83 = vld [vmem:[#allocation2 + $0xb8] sm:$0xff]
    %v84 = vld [vmem:[#allocation2 + $0xc0] sm:$0xff]
    %v85 = vld [vmem:[#allocation2 + $0xc8] sm:$0xff]
    %v86 = vld [vmem:[#allocation2 + $0xd0] sm:$0xff]
    %v87 = vld [vmem:[#allocation2 + $0xd8] sm:$0xff]
    %v88 = vld [vmem:[#allocation2 + $0xe0] sm:$0xff]
    %v89 = vld [vmem:[#allocation2 + $0xe8] sm:$0xff]
    %v90 = vld [vmem:[#allocation2 + $0xf0] sm:$0xff]
    %v91 = vld [vmem:[#allocation2 + $0xf8] sm:$0xff]
    %v92 = vtanh.pop %v60
    %v93 = vtanh.pop %v61
    %v94 = vtanh.pop %v62
    %v95 = vtanh.pop %v63
    %v96 = vtanh.pop %v64
    %v97 = vtanh.pop %v65
    %v98 = vtanh.pop %v66
    %v99 = vtanh.pop %v67
    %v100 = vtanh.pop %v68
    %v101 = vtanh.pop %v69
    %v102 = vtanh.pop %v70
    %v103 = vtanh.pop %v71
    %v104 = vtanh.pop %v72
    %v105 = vtanh.pop %v73
    %v106 = vtanh.pop %v74
    %v107 = vtanh.pop %v75
    %v108 = vtanh.pop %v76
    %v109 = vtanh.pop %v77
    %v110 = vtanh.pop %v78
    %v111 = vtanh.pop %v79
    %v112 = vtanh.pop %v80
    %v113 = vtanh.pop %v81
    %v114 = vtanh.pop %v82
    %v115 = vtanh.pop %v83
    %v116 = vtanh.pop %v84
    %v117 = vtanh.pop %v85
    %v118 = vtanh.pop %v86
    %v119 = vtanh.pop %v87
    %v120 = vtanh.pop %v88
    %v121 = vtanh.pop %v89
    %v122 = vtanh.pop %v90
    %v123 = vtanh.pop %v91
    %v124 = vld [vmem:[#allocation5] sm:$0xff]
    %v125 = vld [vmem:[#allocation5 + $0x8] sm:$0xff]
    %v126 = vld [vmem:[#allocation5 + $0x10] sm:$0xff]
    %v127 = vld [vmem:[#allocation5 + $0x18] sm:$0xff]
    %v128 = vld [vmem:[#allocation5 + $0x20] sm:$0xff]
    %v129 = vld [vmem:[#allocation5 + $0x28] sm:$0xff]
    %v130 = vld [vmem:[#allocation5 + $0x30] sm:$0xff]
    %v131 = vld [vmem:[#allocation5 + $0x38] sm:$0xff]
    %v132 = vld [vmem:[#allocation5 + $0x40] sm:$0xff]
    %v133 = vld [vmem:[#allocation5 + $0x48] sm:$0xff]
    %v134 = vld [vmem:[#allocation5 + $0x50] sm:$0xff]
    %v135 = vld [vmem:[#allocation5 + $0x58] sm:$0xff]
    %v136 = vld [vmem:[#allocation5 + $0x60] sm:$0xff]
    %v137 = vld [vmem:[#allocation5 + $0x68] sm:$0xff]
    %v138 = vld [vmem:[#allocation5 + $0x70] sm:$0xff]
    %v139 = vld [vmem:[#allocation5 + $0x78] sm:$0xff]
    %v140 = vld [vmem:[#allocation5 + $0x80] sm:$0xff]
    %v141 = vld [vmem:[#allocation5 + $0x88] sm:$0xff]
    %v142 = vld [vmem:[#allocation5 + $0x90] sm:$0xff]
    %v143 = vld [vmem:[#allocation5 + $0x98] sm:$0xff]
    %v144 = vld [vmem:[#allocation5 + $0xa0] sm:$0xff]
    %v145 = vld [vmem:[#allocation5 + $0xa8] sm:$0xff]
    %v146 = vld [vmem:[#allocation5 + $0xb0] sm:$0xff]
    %v147 = vld [vmem:[#allocation5 + $0xb8] sm:$0xff]
    %v148 = vld [vmem:[#allocation5 + $0xc0] sm:$0xff]
    %v149 = vld [vmem:[#allocation5 + $0xc8] sm:$0xff]
    %v150 = vld [vmem:[#allocation5 + $0xd0] sm:$0xff]
    %v151 = vld [vmem:[#allocation5 + $0xd8] sm:$0xff]
    %v152 = vld [vmem:[#allocation5 + $0xe0] sm:$0xff]
    %v153 = vld [vmem:[#allocation5 + $0xe8] sm:$0xff]
    %v154 = vld [vmem:[#allocation5 + $0xf0] sm:$0xff]
    %v155 = vld [vmem:[#allocation5 + $0xf8] sm:$0xff]
    %v156 = vxor.u32 %v124, 2147483648
    %v157 = vxor.u32 %v125, 2147483648
    %v158 = vxor.u32 %v126, 2147483648
    %v159 = vxor.u32 %v127, 2147483648
    %v160 = vxor.u32 %v128, 2147483648
    %v161 = vxor.u32 %v129, 2147483648
    %v162 = vxor.u32 %v130, 2147483648
    %v163 = vxor.u32 %v131, 2147483648
    %v164 = vxor.u32 %v132, 2147483648
    %v165 = vxor.u32 %v133, 2147483648
    %v166 = vxor.u32 %v134, 2147483648
    %v167 = vxor.u32 %v135, 2147483648
    %v168 = vxor.u32 %v136, 2147483648
    %v169 = vxor.u32 %v137, 2147483648
    %v170 = vxor.u32 %v138, 2147483648
    %v171 = vxor.u32 %v139, 2147483648
    %v172 = vxor.u32 %v140, 2147483648
    %v173 = vxor.u32 %v141, 2147483648
    %v174 = vxor.u32 %v142, 2147483648
    %v175 = vxor.u32 %v143, 2147483648
    %v176 = vxor.u32 %v144, 2147483648
    %v177 = vxor.u32 %v145, 2147483648
    %v178 = vxor.u32 %v146, 2147483648
    %v179 = vxor.u32 %v147, 2147483648
    %v180 = vxor.u32 %v148, 2147483648
    %v181 = vxor.u32 %v149, 2147483648
    %v182 = vxor.u32 %v150, 2147483648
    %v183 = vxor.u32 %v151, 2147483648
    %v184 = vxor.u32 %v152, 2147483648
    %v185 = vxor.u32 %v153, 2147483648
    %v186 = vxor.u32 %v154, 2147483648
    %v187 = vxor.u32 %v155, 2147483648
    %v188 = vmul.f32 %v156, 1.442695
    %v189 = vpow.pop %v188
    %v190 = vmul.f32 %v157, 1.442695
    %v191 = vpow.pop %v190
    %v192 = vmul.f32 %v158, 1.442695
    %v193 = vpow.pop %v192
    %v194 = vmul.f32 %v159, 1.442695
    %v195 = vpow.pop %v194
    %v196 = vmul.f32 %v160, 1.442695
    %v197 = vpow.pop %v196
    %v198 = vmul.f32 %v161, 1.442695
    %v199 = vpow.pop %v198
    %v200 = vmul.f32 %v162, 1.442695
    %v201 = vpow.pop %v200
    %v202 = vmul.f32 %v163, 1.442695
    %v203 = vpow.pop %v202
    %v204 = vmul.f32 %v164, 1.442695
    %v205 = vpow.pop %v204
    %v206 = vmul.f32 %v165, 1.442695
    %v207 = vpow.pop %v206
    %v208 = vmul.f32 %v166, 1.442695
    %v209 = vpow.pop %v208
    %v210 = vmul.f32 %v167, 1.442695
    %v211 = vpow.pop %v210
    %v212 = vmul.f32 %v168, 1.442695
    %v213 = vpow.pop %v212
    %v214 = vmul.f32 %v169, 1.442695
    %v215 = vpow.pop %v214
    %v216 = vmul.f32 %v170, 1.442695
    %v217 = vpow.pop %v216
    %v218 = vmul.f32 %v171, 1.442695
    %v219 = vpow.pop %v218
    %v220 = vmul.f32 %v172, 1.442695
    %v221 = vpow.pop %v220
    %v222 = vmul.f32 %v173, 1.442695
    %v223 = vpow.pop %v222
    %v224 = vmul.f32 %v174, 1.442695
    %v225 = vpow.pop %v224
    %v226 = vmul.f32 %v175, 1.442695
    %v227 = vpow.pop %v226
    %v228 = vmul.f32 %v176, 1.442695
    %v229 = vpow.pop %v228
    %v230 = vmul.f32 %v177, 1.442695
    %v231 = vpow.pop %v230
    %v232 = vmul.f32 %v178, 1.442695
    %v233 = vpow.pop %v232
    %v234 = vmul.f32 %v179, 1.442695
    %v235 = vpow.pop %v234
    %v236 = vmul.f32 %v180, 1.442695
    %v237 = vpow.pop %v236
    %v238 = vmul.f32 %v181, 1.442695
    %v239 = vpow.pop %v238
    %v240 = vmul.f32 %v182, 1.442695
    %v241 = vpow.pop %v240
    %v242 = vmul.f32 %v183, 1.442695
    %v243 = vpow.pop %v242
    %v244 = vmul.f32 %v184, 1.442695
    %v245 = vpow.pop %v244
    %v246 = vmul.f32 %v185, 1.442695
    %v247 = vpow.pop %v246
    %v248 = vmul.f32 %v186, 1.442695
    %v249 = vpow.pop %v248
    %v250 = vmul.f32 %v187, 1.442695
    %v251 = vpow.pop %v250
    %v252 = vadd.f32 %v189, 1.0
    %v253 = vadd.f32 %v191, 1.0
    %v254 = vadd.f32 %v193, 1.0
    %v255 = vadd.f32 %v195, 1.0
    %v256 = vadd.f32 %v197, 1.0
    %v257 = vadd.f32 %v199, 1.0
    %v258 = vadd.f32 %v201, 1.0
    %v259 = vadd.f32 %v203, 1.0
    %v260 = vadd.f32 %v205, 1.0
    %v261 = vadd.f32 %v207, 1.0
    %v262 = vadd.f32 %v209, 1.0
    %v263 = vadd.f32 %v211, 1.0
    %v264 = vadd.f32 %v213, 1.0
    %v265 = vadd.f32 %v215, 1.0
    %v266 = vadd.f32 %v217, 1.0
    %v267 = vadd.f32 %v219, 1.0
    %v268 = vadd.f32 %v221, 1.0
    %v269 = vadd.f32 %v223, 1.0
    %v270 = vadd.f32 %v225, 1.0
    %v271 = vadd.f32 %v227, 1.0
    %v272 = vadd.f32 %v229, 1.0
    %v273 = vadd.f32 %v231, 1.0
    %v274 = vadd.f32 %v233, 1.0
    %v275 = vadd.f32 %v235, 1.0
    %v276 = vadd.f32 %v237, 1.0
    %v277 = vadd.f32 %v239, 1.0
    %v278 = vadd.f32 %v241, 1.0
    %v279 = vadd.f32 %v243, 1.0
    %v280 = vadd.f32 %v245, 1.0
    %v281 = vadd.f32 %v247, 1.0
    %v282 = vadd.f32 %v249, 1.0
    %v283 = vadd.f32 %v251, 1.0
    %v284 = vrcp.pop %v252
    %v285 = vmul.f32 1.0, %v284
    %v286 = vrcp.pop %v253
    %v287 = vmul.f32 1.0, %v286
    %v288 = vrcp.pop %v254
    %v289 = vmul.f32 1.0, %v288
    %v290 = vrcp.pop %v255
    %v291 = vmul.f32 1.0, %v290
    %v292 = vrcp.pop %v256
    %v293 = vmul.f32 1.0, %v292
    %v294 = vrcp.pop %v257
    %v295 = vmul.f32 1.0, %v294
    %v296 = vrcp.pop %v258
    %v297 = vmul.f32 1.0, %v296
    %v298 = vrcp.pop %v259
    %v299 = vmul.f32 1.0, %v298
    %v300 = vrcp.pop %v260
    %v301 = vmul.f32 1.0, %v300
    %v302 = vrcp.pop %v261
    %v303 = vmul.f32 1.0, %v302
    %v304 = vrcp.pop %v262
    %v305 = vmul.f32 1.0, %v304
    %v306 = vrcp.pop %v263
    %v307 = vmul.f32 1.0, %v306
    %v308 = vrcp.pop %v264
    %v309 = vmul.f32 1.0, %v308
    %v310 = vrcp.pop %v265
    %v311 = vmul.f32 1.0, %v310
    %v312 = vrcp.pop %v266
    %v313 = vmul.f32 1.0, %v312
    %v314 = vrcp.pop %v267
    %v315 = vmul.f32 1.0, %v314
    %v316 = vrcp.pop %v268
    %v317 = vmul.f32 1.0, %v316
    %v318 = vrcp.pop %v269
    %v319 = vmul.f32 1.0, %v318
    %v320 = vrcp.pop %v270
    %v321 = vmul.f32 1.0, %v320
    %v322 = vrcp.pop %v271
    %v323 = vmul.f32 1.0, %v322
    %v324 = vrcp.pop %v272
    %v325 = vmul.f32 1.0, %v324
    %v326 = vrcp.pop %v273
    %v327 = vmul.f32 1.0, %v326
    %v328 = vrcp.pop %v274
    %v329 = vmul.f32 1.0, %v328
    %v330 = vrcp.pop %v275
    %v331 = vmul.f32 1.0, %v330
    %v332 = vrcp.pop %v276
    %v333 = vmul.f32 1.0, %v332
    %v334 = vrcp.pop %v277
    %v335 = vmul.f32 1.0, %v334
    %v336 = vrcp.pop %v278
    %v337 = vmul.f32 1.0, %v336
    %v338 = vrcp.pop %v279
    %v339 = vmul.f32 1.0, %v338
    %v340 = vrcp.pop %v280
    %v341 = vmul.f32 1.0, %v340
    %v342 = vrcp.pop %v281
    %v343 = vmul.f32 1.0, %v342
    %v344 = vrcp.pop %v282
    %v345 = vmul.f32 1.0, %v344
    %v346 = vrcp.pop %v283
    %v347 = vmul.f32 1.0, %v346
    %v348 = vmul.f32 %v92, %v285
    %v349 = vmul.f32 %v93, %v287
    %v350 = vmul.f32 %v94, %v289
    %v351 = vmul.f32 %v95, %v291
    %v352 = vmul.f32 %v96, %v293
    %v353 = vmul.f32 %v97, %v295
    %v354 = vmul.f32 %v98, %v297
    %v355 = vmul.f32 %v99, %v299
    %v356 = vmul.f32 %v100, %v301
    %v357 = vmul.f32 %v101, %v303
    %v358 = vmul.f32 %v102, %v305
    %v359 = vmul.f32 %v103, %v307
    %v360 = vmul.f32 %v104, %v309
    %v361 = vmul.f32 %v105, %v311
    %v362 = vmul.f32 %v106, %v313
    %v363 = vmul.f32 %v107, %v315
    %v364 = vmul.f32 %v108, %v317
    %v365 = vmul.f32 %v109, %v319
    %v366 = vmul.f32 %v110, %v321
    %v367 = vmul.f32 %v111, %v323
    %v368 = vmul.f32 %v112, %v325
    %v369 = vmul.f32 %v113, %v327
    %v370 = vmul.f32 %v114, %v329
    %v371 = vmul.f32 %v115, %v331
    %v372 = vmul.f32 %v116, %v333
    %v373 = vmul.f32 %v117, %v335
    %v374 = vmul.f32 %v118, %v337
    %v375 = vmul.f32 %v119, %v339
    %v376 = vmul.f32 %v120, %v341
    %v377 = vmul.f32 %v121, %v343
    %v378 = vmul.f32 %v122, %v345
    %v379 = vmul.f32 %v123, %v347
    %380 = vst [vmem:[#allocation11] sm:$0xff] %v348
    %381 = vst [vmem:[#allocation11 + $0x8] sm:$0xff] %v349
    %382 = vst [vmem:[#allocation11 + $0x10] sm:$0xff] %v350
    %383 = vst [vmem:[#allocation11 + $0x18] sm:$0xff] %v351
    %384 = vst [vmem:[#allocation11 + $0x20] sm:$0xff] %v352
    %385 = vst [vmem:[#allocation11 + $0x28] sm:$0xff] %v353
    %386 = vst [vmem:[#allocation11 + $0x30] sm:$0xff] %v354
    %387 = vst [vmem:[#allocation11 + $0x38] sm:$0xff] %v355
    %388 = vst [vmem:[#allocation11 + $0x40] sm:$0xff] %v356
    %389 = vst [vmem:[#allocation11 + $0x48] sm:$0xff] %v357
    %390 = vst [vmem:[#allocation11 + $0x50] sm:$0xff] %v358
    %391 = vst [vmem:[#allocation11 + $0x58] sm:$0xff] %v359
    %392 = vst [vmem:[#allocation11 + $0x60] sm:$0xff] %v360
    %393 = vst [vmem:[#allocation11 + $0x68] sm:$0xff] %v361
    %394 = vst [vmem:[#allocation11 + $0x70] sm:$0xff] %v362
    %395 = vst [vmem:[#allocation11 + $0x78] sm:$0xff] %v363
    %396 = vst [vmem:[#allocation11 + $0x80] sm:$0xff] %v364
    %397 = vst [vmem:[#allocation11 + $0x88] sm:$0xff] %v365
    %398 = vst [vmem:[#allocation11 + $0x90] sm:$0xff] %v366
    %399 = vst [vmem:[#allocation11 + $0x98] sm:$0xff] %v367
    %400 = vst [vmem:[#allocation11 + $0xa0] sm:$0xff] %v368
    %401 = vst [vmem:[#allocation11 + $0xa8] sm:$0xff] %v369
    %402 = vst [vmem:[#allocation11 + $0xb0] sm:$0xff] %v370
    %403 = vst [vmem:[#allocation11 + $0xb8] sm:$0xff] %v371
    %404 = vst [vmem:[#allocation11 + $0xc0] sm:$0xff] %v372
    %405 = vst [vmem:[#allocation11 + $0xc8] sm:$0xff] %v373
    %406 = vst [vmem:[#allocation11 + $0xd0] sm:$0xff] %v374
    %407 = vst [vmem:[#allocation11 + $0xd8] sm:$0xff] %v375
    %408 = vst [vmem:[#allocation11 + $0xe0] sm:$0xff] %v376
    %409 = vst [vmem:[#allocation11 + $0xe8] sm:$0xff] %v377
    %410 = vst [vmem:[#allocation11 + $0xf0] sm:$0xff] %v378
    %411 = vst [vmem:[#allocation11 + $0xf8] sm:$0xff] %v379
    %v412 = vpack.c.bf16 %v349, %v348
    %v413 = vpack.c.bf16 %v351, %v350
    %v414 = vpack.c.bf16 %v353, %v352
    %v415 = vpack.c.bf16 %v355, %v354
    %v416 = vpack.c.bf16 %v357, %v356
    %v417 = vpack.c.bf16 %v359, %v358
    %v418 = vpack.c.bf16 %v361, %v360
    %v419 = vpack.c.bf16 %v363, %v362
    %v420 = vpack.c.bf16 %v365, %v364
    %v421 = vpack.c.bf16 %v367, %v366
    %v422 = vpack.c.bf16 %v369, %v368
    %v423 = vpack.c.bf16 %v371, %v370
    %v424 = vpack.c.bf16 %v373, %v372
    %v425 = vpack.c.bf16 %v375, %v374
    %v426 = vpack.c.bf16 %v377, %v376
    %v427 = vpack.c.bf16 %v379, %v378
    %v444 = vunpack.c.l.b16 %v412
    %v445 = vunpack.c.h.b16 %v412
    %v446 = vunpack.c.l.b16 %v413
    %v447 = vunpack.c.h.b16 %v413
    %v448 = vunpack.c.l.b16 %v414
    %v449 = vunpack.c.h.b16 %v414
    %v450 = vunpack.c.l.b16 %v415
    %v451 = vunpack.c.h.b16 %v415
    %v452 = vunpack.c.l.b16 %v416
    %v453 = vunpack.c.h.b16 %v416
    %v454 = vunpack.c.l.b16 %v417
    %v455 = vunpack.c.h.b16 %v417
    %v456 = vunpack.c.l.b16 %v418
    %v457 = vunpack.c.h.b16 %v418
    %v458 = vunpack.c.l.b16 %v419
    %v459 = vunpack.c.h.b16 %v419
    %v460 = vunpack.c.l.b16 %v420
    %v461 = vunpack.c.h.b16 %v420
    %v462 = vunpack.c.l.b16 %v421
    %v463 = vunpack.c.h.b16 %v421
    %v464 = vunpack.c.l.b16 %v422
    %v465 = vunpack.c.h.b16 %v422
    %v466 = vunpack.c.l.b16 %v423
    %v467 = vunpack.c.h.b16 %v423
    %v468 = vunpack.c.l.b16 %v424
    %v469 = vunpack.c.h.b16 %v424
    %v470 = vunpack.c.l.b16 %v425
    %v471 = vunpack.c.h.b16 %v425
    %v472 = vunpack.c.l.b16 %v426
    %v473 = vunpack.c.h.b16 %v426
    %v474 = vunpack.c.l.b16 %v427
    %v475 = vunpack.c.h.b16 %v427
    %v476 = vpack.c.b16 %v444, %v444
    %v477 = vpack.c.b16 %v445, %v445
    %v478 = vpack.c.b16 %v446, %v446
    %v479 = vpack.c.b16 %v447, %v447
    %v480 = vpack.c.b16 %v448, %v448
    %v481 = vpack.c.b16 %v449, %v449
    %v482 = vpack.c.b16 %v450, %v450
    %v483 = vpack.c.b16 %v451, %v451
    %v484 = vpack.c.b16 %v452, %v452
    %v485 = vpack.c.b16 %v453, %v453
    %v486 = vpack.c.b16 %v454, %v454
    %v487 = vpack.c.b16 %v455, %v455
    %v488 = vpack.c.b16 %v456, %v456
    %v489 = vpack.c.b16 %v457, %v457
    %v490 = vpack.c.b16 %v458, %v458
    %v491 = vpack.c.b16 %v459, %v459
    %v492 = vpack.c.b16 %v460, %v460
    %v493 = vpack.c.b16 %v461, %v461
    %v494 = vpack.c.b16 %v462, %v462
    %v495 = vpack.c.b16 %v463, %v463
    %v496 = vpack.c.b16 %v464, %v464
    %v497 = vpack.c.b16 %v465, %v465
    %v498 = vpack.c.b16 %v466, %v466
    %v499 = vpack.c.b16 %v467, %v467
    %v500 = vpack.c.b16 %v468, %v468
    %v501 = vpack.c.b16 %v469, %v469
    %v502 = vpack.c.b16 %v470, %v470
    %v503 = vpack.c.b16 %v471, %v471
    %v504 = vpack.c.b16 %v472, %v472
    %v505 = vpack.c.b16 %v473, %v473
    %v506 = vpack.c.b16 %v474, %v474
    %v507 = vpack.c.b16 %v475, %v475
    %540 = vst [vmem:[#allocation8] sm:$0xf] %v476
    %541 = vst [vmem:[#allocation8 + $0x4] sm:$0xf] %v477
    %542 = vst [vmem:[#allocation8 + $0x8] sm:$0xf] %v478
    %543 = vst [vmem:[#allocation8 + $0xc] sm:$0xf] %v479
    %544 = vst [vmem:[#allocation8 + $0x10] sm:$0xf] %v480
    %545 = vst [vmem:[#allocation8 + $0x14] sm:$0xf] %v481
    %546 = vst [vmem:[#allocation8 + $0x18] sm:$0xf] %v482
    %547 = vst [vmem:[#allocation8 + $0x1c] sm:$0xf] %v483
    %548 = vst [vmem:[#allocation8 + $0x20] sm:$0xf] %v484
    %549 = vst [vmem:[#allocation8 + $0x24] sm:$0xf] %v485
    %550 = vst [vmem:[#allocation8 + $0x28] sm:$0xf] %v486
    %551 = vst [vmem:[#allocation8 + $0x2c] sm:$0xf] %v487
    %552 = vst [vmem:[#allocation8 + $0x30] sm:$0xf] %v488
    %553 = vst [vmem:[#allocation8 + $0x34] sm:$0xf] %v489
    %554 = vst [vmem:[#allocation8 + $0x38] sm:$0xf] %v490
    %555 = vst [vmem:[#allocation8 + $0x3c] sm:$0xf] %v491
    %556 = vst [vmem:[#allocation8 + $0x40] sm:$0xf] %v492
    %557 = vst [vmem:[#allocation8 + $0x44] sm:$0xf] %v493
    %558 = vst [vmem:[#allocation8 + $0x48] sm:$0xf] %v494
    %559 = vst [vmem:[#allocation8 + $0x4c] sm:$0xf] %v495
    %560 = vst [vmem:[#allocation8 + $0x50] sm:$0xf] %v496
    %561 = vst [vmem:[#allocation8 + $0x54] sm:$0xf] %v497
    %562 = vst [vmem:[#allocation8 + $0x58] sm:$0xf] %v498
    %563 = vst [vmem:[#allocation8 + $0x5c] sm:$0xf] %v499
    %564 = vst [vmem:[#allocation8 + $0x60] sm:$0xf] %v500
    %565 = vst [vmem:[#allocation8 + $0x64] sm:$0xf] %v501
    %566 = vst [vmem:[#allocation8 + $0x68] sm:$0xf] %v502
    %567 = vst [vmem:[#allocation8 + $0x6c] sm:$0xf] %v503
    %568 = vst [vmem:[#allocation8 + $0x70] sm:$0xf] %v504
    %569 = vst [vmem:[#allocation8 + $0x74] sm:$0xf] %v505
    %570 = vst [vmem:[#allocation8 + $0x78] sm:$0xf] %v506
    %571 = vst [vmem:[#allocation8 + $0x7c] sm:$0xf] %v507
    %v572 = vld [vmem:[#allocation7] sm:$0xff]
    %v573 = vld [vmem:[#allocation7 + $0x8] sm:$0xff]
    %v574 = vld [vmem:[#allocation7 + $0x10] sm:$0xff]
    %v575 = vld [vmem:[#allocation7 + $0x18] sm:$0xff]
    %v576 = vld [vmem:[#allocation7 + $0x20] sm:$0xff]
    %v577 = vld [vmem:[#allocation7 + $0x28] sm:$0xff]
    %v578 = vld [vmem:[#allocation7 + $0x30] sm:$0xff]
    %v579 = vld [vmem:[#allocation7 + $0x38] sm:$0xff]
    %v580 = vld [vmem:[#allocation7 + $0x40] sm:$0xff]
    %v581 = vld [vmem:[#allocation7 + $0x48] sm:$0xff]
    %v582 = vld [vmem:[#allocation7 + $0x50] sm:$0xff]
    %v583 = vld [vmem:[#allocation7 + $0x58] sm:$0xff]
    %v584 = vld [vmem:[#allocation7 + $0x60] sm:$0xff]
    %v585 = vld [vmem:[#allocation7 + $0x68] sm:$0xff]
    %v586 = vld [vmem:[#allocation7 + $0x70] sm:$0xff]
    %v587 = vld [vmem:[#allocation7 + $0x78] sm:$0xff]
    %v588 = vld [vmem:[#allocation7 + $0x80] sm:$0xff]
    %v589 = vld [vmem:[#allocation7 + $0x88] sm:$0xff]
    %v590 = vld [vmem:[#allocation7 + $0x90] sm:$0xff]
    %v591 = vld [vmem:[#allocation7 + $0x98] sm:$0xff]
    %v592 = vld [vmem:[#allocation7 + $0xa0] sm:$0xff]
    %v593 = vld [vmem:[#allocation7 + $0xa8] sm:$0xff]
    %v594 = vld [vmem:[#allocation7 + $0xb0] sm:$0xff]
    %v595 = vld [vmem:[#allocation7 + $0xb8] sm:$0xff]
    %v596 = vld [vmem:[#allocation7 + $0xc0] sm:$0xff]
    %v597 = vld [vmem:[#allocation7 + $0xc8] sm:$0xff]
    %v598 = vld [vmem:[#allocation7 + $0xd0] sm:$0xff]
    %v599 = vld [vmem:[#allocation7 + $0xd8] sm:$0xff]
    %v600 = vld [vmem:[#allocation7 + $0xe0] sm:$0xff]
    %v601 = vld [vmem:[#allocation7 + $0xe8] sm:$0xff]
    %v602 = vld [vmem:[#allocation7 + $0xf0] sm:$0xff]
    %v603 = vld [vmem:[#allocation7 + $0xf8] sm:$0xff]
    %v604 = vpack.c.bf16 %v573, %v572
    %v605 = vpack.c.bf16 %v575, %v574
    %v606 = vpack.c.bf16 %v577, %v576
    %v607 = vpack.c.bf16 %v579, %v578
    %v608 = vpack.c.bf16 %v581, %v580
    %v609 = vpack.c.bf16 %v583, %v582
    %v610 = vpack.c.bf16 %v585, %v584
    %v611 = vpack.c.bf16 %v587, %v586
    %v612 = vpack.c.bf16 %v589, %v588
    %v613 = vpack.c.bf16 %v591, %v590
    %v614 = vpack.c.bf16 %v593, %v592
    %v615 = vpack.c.bf16 %v595, %v594
    %v616 = vpack.c.bf16 %v597, %v596
    %v617 = vpack.c.bf16 %v599, %v598
    %v618 = vpack.c.bf16 %v601, %v600
    %v619 = vpack.c.bf16 %v603, %v602
    %v636 = vunpack.c.l.b16 %v604
    %v637 = vunpack.c.h.b16 %v604
    %v638 = vunpack.c.l.b16 %v605
    %v639 = vunpack.c.h.b16 %v605
    %v640 = vunpack.c.l.b16 %v606
    %v641 = vunpack.c.h.b16 %v606
    %v642 = vunpack.c.l.b16 %v607
    %v643 = vunpack.c.h.b16 %v607
    %v644 = vunpack.c.l.b16 %v608
    %v645 = vunpack.c.h.b16 %v608
    %v646 = vunpack.c.l.b16 %v609
    %v647 = vunpack.c.h.b16 %v609
    %v648 = vunpack.c.l.b16 %v610
    %v649 = vunpack.c.h.b16 %v610
    %v650 = vunpack.c.l.b16 %v611
    %v651 = vunpack.c.h.b16 %v611
    %v652 = vunpack.c.l.b16 %v612
    %v653 = vunpack.c.h.b16 %v612
    %v654 = vunpack.c.l.b16 %v613
    %v655 = vunpack.c.h.b16 %v613
    %v656 = vunpack.c.l.b16 %v614
    %v657 = vunpack.c.h.b16 %v614
    %v658 = vunpack.c.l.b16 %v615
    %v659 = vunpack.c.h.b16 %v615
    %v660 = vunpack.c.l.b16 %v616
    %v661 = vunpack.c.h.b16 %v616
    %v662 = vunpack.c.l.b16 %v617
    %v663 = vunpack.c.h.b16 %v617
    %v664 = vunpack.c.l.b16 %v618
    %v665 = vunpack.c.h.b16 %v618
    %v666 = vunpack.c.l.b16 %v619
    %v667 = vunpack.c.h.b16 %v619
    %v668 = vpack.c.b16 %v636, %v636
    %v669 = vpack.c.b16 %v637, %v637
    %v670 = vpack.c.b16 %v638, %v638
    %v671 = vpack.c.b16 %v639, %v639
    %v672 = vpack.c.b16 %v640, %v640
    %v673 = vpack.c.b16 %v641, %v641
    %v674 = vpack.c.b16 %v642, %v642
    %v675 = vpack.c.b16 %v643, %v643
    %v676 = vpack.c.b16 %v644, %v644
    %v677 = vpack.c.b16 %v645, %v645
    %v678 = vpack.c.b16 %v646, %v646
    %v679 = vpack.c.b16 %v647, %v647
    %v680 = vpack.c.b16 %v648, %v648
    %v681 = vpack.c.b16 %v649, %v649
    %v682 = vpack.c.b16 %v650, %v650
    %v683 = vpack.c.b16 %v651, %v651
    %v684 = vpack.c.b16 %v652, %v652
    %v685 = vpack.c.b16 %v653, %v653
    %v686 = vpack.c.b16 %v654, %v654
    %v687 = vpack.c.b16 %v655, %v655
    %v688 = vpack.c.b16 %v656, %v656
    %v689 = vpack.c.b16 %v657, %v657
    %v690 = vpack.c.b16 %v658, %v658
    %v691 = vpack.c.b16 %v659, %v659
    %v692 = vpack.c.b16 %v660, %v660
    %v693 = vpack.c.b16 %v661, %v661
    %v694 = vpack.c.b16 %v662, %v662
    %v695 = vpack.c.b16 %v663, %v663
    %v696 = vpack.c.b16 %v664, %v664
    %v697 = vpack.c.b16 %v665, %v665
    %v698 = vpack.c.b16 %v666, %v666
    %v699 = vpack.c.b16 %v667, %v667
    %732 = vst [vmem:[#allocation9] sm:$0xf] %v668
    %733 = vst [vmem:[#allocation9 + $0x4] sm:$0xf] %v669
    %734 = vst [vmem:[#allocation9 + $0x8] sm:$0xf] %v670
    %735 = vst [vmem:[#allocation9 + $0xc] sm:$0xf] %v671
    %736 = vst [vmem:[#allocation9 + $0x10] sm:$0xf] %v672
    %737 = vst [vmem:[#allocation9 + $0x14] sm:$0xf] %v673
    %738 = vst [vmem:[#allocation9 + $0x18] sm:$0xf] %v674
    %739 = vst [vmem:[#allocation9 + $0x1c] sm:$0xf] %v675
    %740 = vst [vmem:[#allocation9 + $0x20] sm:$0xf] %v676
    %741 = vst [vmem:[#allocation9 + $0x24] sm:$0xf] %v677
    %742 = vst [vmem:[#allocation9 + $0x28] sm:$0xf] %v678
    %743 = vst [vmem:[#allocation9 + $0x2c] sm:$0xf] %v679
    %744 = vst [vmem:[#allocation9 + $0x30] sm:$0xf] %v680
    %745 = vst [vmem:[#allocation9 + $0x34] sm:$0xf] %v681
    %746 = vst [vmem:[#allocation9 + $0x38] sm:$0xf] %v682
    %747 = vst [vmem:[#allocation9 + $0x3c] sm:$0xf] %v683
    %748 = vst [vmem:[#allocation9 + $0x40] sm:$0xf] %v684
    %749 = vst [vmem:[#allocation9 + $0x44] sm:$0xf] %v685
    %750 = vst [vmem:[#allocation9 + $0x48] sm:$0xf] %v686
    %751 = vst [vmem:[#allocation9 + $0x4c] sm:$0xf] %v687
    %752 = vst [vmem:[#allocation9 + $0x50] sm:$0xf] %v688
    %753 = vst [vmem:[#allocation9 + $0x54] sm:$0xf] %v689
    %754 = vst [vmem:[#allocation9 + $0x58] sm:$0xf] %v690
    %755 = vst [vmem:[#allocation9 + $0x5c] sm:$0xf] %v691
    %756 = vst [vmem:[#allocation9 + $0x60] sm:$0xf] %v692
    %757 = vst [vmem:[#allocation9 + $0x64] sm:$0xf] %v693
    %758 = vst [vmem:[#allocation9 + $0x68] sm:$0xf] %v694
    %759 = vst [vmem:[#allocation9 + $0x6c] sm:$0xf] %v695
    %760 = vst [vmem:[#allocation9 + $0x70] sm:$0xf] %v696
    %761 = vst [vmem:[#allocation9 + $0x74] sm:$0xf] %v697
    %762 = vst [vmem:[#allocation9 + $0x78] sm:$0xf] %v698
    %763 = vst [vmem:[#allocation9 + $0x7c] sm:$0xf] %v699
    // Predicated region
    $region26: #{tpu_custom_call.1} parent=1 // pred_check
      _
    $region27: #{tpu_custom_call.1} parent=1 // pred_check_branch
      %765 = sbr.rel (0) target = $region29
    $region28: #{tpu_custom_call.1} parent=1 // pred_region
      %s767 = ssub.s32 2048, 2048
      %768 = vsyncadd [#allocation4], %s767
      %s769 = sshll.u32 [#allocation8], 4
      %s770 = int_to_ptr.vmem [resolvable:$true] %s769
      %775 = dma.vmem_to_hbm [thread:$0]  %s770, 2048, %s3, [#allocation4], 64, 64, 4
    $region29: #{tpu_custom_call.1} parent=1 // pred_fallthru
      _
    // Predicated region
    $region30: #{tpu_custom_call.1} parent=1 // pred_check
      _
    $region31: #{tpu_custom_call.1} parent=1 // pred_check_branch
      %777 = sbr.rel (0) target = $region33
    $region32: #{tpu_custom_call.1} parent=1 // pred_region
      %s779 = ssub.s32 2048, 2048
      %780 = vsyncadd [#allocation10], %s779
      %s781 = sshll.u32 [#allocation9], 4
      %s782 = int_to_ptr.vmem [resolvable:$true] %s781
      %787 = dma.vmem_to_hbm [thread:$0]  %s782, 2048, %s4, [#allocation10], 64, 64, 4
    $region33: #{tpu_custom_call.1} parent=1 // pred_fallthru
      _
    // Predicated region
    $region34: #{tpu_custom_call.1} parent=1 // pred_check
      _
    $region35: #{tpu_custom_call.1} parent=1 // pred_check_branch
      %789 = sbr.rel (0) target = $region37
    $region36: #{tpu_custom_call.1} parent=1 // pred_region
      %s791 = ssub.s32 4096, 4096
      %792 = vsyncadd [#allocation10], %s791
      %s793 = sshll.u32 [#allocation11], 4
      %s794 = int_to_ptr.vmem [resolvable:$true] %s793
      %799 = dma.vmem_to_hbm [thread:$0]  %s794, 4096, %s5, [#allocation10], 128, 128, 8
    $region37: #{tpu_custom_call.1} parent=1 // pred_fallthru
      _
    // Predicated region
    $region38: #{tpu_custom_call.1} parent=1 // pred_check
      _
    $region39: #{tpu_custom_call.1} parent=1 // pred_check_branch
      %801 = sbr.rel (0) target = $region41
    $region40: #{tpu_custom_call.1} parent=1 // pred_region
      %802 = dma.done [#allocation4], 2048
    $region41: #{tpu_custom_call.1} parent=1 // pred_fallthru
      _
    // Predicated region
    $region42: #{tpu_custom_call.1} parent=1 // pred_check
      _
    $region43: #{tpu_custom_call.1} parent=1 // pred_check_branch
      %804 = sbr.rel (0) target = $region45
    $region44: #{tpu_custom_call.1} parent=1 // pred_region
      %805 = dma.done [#allocation10], 2048
    $region45: #{tpu_custom_call.1} parent=1 // pred_fallthru
      _
    // Predicated region
    $region46: #{tpu_custom_call.1} parent=1 // pred_check
      _
    $region47: #{tpu_custom_call.1} parent=1 // pred_check_branch
      %807 = sbr.rel (0) target = $region49
    $region48: #{tpu_custom_call.1} parent=1 // pred_region
      %808 = dma.done [#allocation10], 4096
    $region49: #{tpu_custom_call.1} parent=1 // pred_fallthru
      _
    %809 = vsyncpa [#allocation3], 1
    %810 = vsyncpa [#allocation6], 1
    %811 = vsyncpa [#allocation4], 1
    %812 = vsyncpa [#allocation10], 1

</llo_original>
